<compile_context>
chip_gen: v7x
topology: tpu7x:2x2x1
jax: 0.10.0
libtpu: 0.0.40
codegen_flags: <defaults>
</compile_context>

<pallas_src>
import functools

import jax
import jax.numpy as jnp
from jax.experimental import pallas as pl
from jax.experimental.pallas import tpu as pltpu


def _round_up(x: int, m: int) -> int:
    return (x + m - 1) // m * m


def _patch_embed_kernel(x_ref, w_ref, b_ref, o_ref):
    # x_ref: (TM, K) patch tile, w_ref: (K, Np) resident weight,
    # b_ref: (1, Np) resident bias, o_ref: (TM, Np) output tile.
    acc = jnp.dot(x_ref[...], w_ref[...], preferred_element_type=jnp.float32)
    o_ref[...] = (acc + b_ref[...].astype(jnp.float32)).astype(o_ref.dtype)


def patch_embed(x, weight, bias, kernel_size, *, block_m=1024,
                compute_dtype=None, out_dtype=None):
    """x: (B, C, H, W) NCHW, weight: (embed_dim, C, kh, kw), bias: (embed_dim,).

    Returns (B, Hp, Wp, embed_dim), matching PyTorch's `proj(x).permute(0,2,3,1)`.

    block_m:       M-tile size (rounded to a multiple of 8 internally).
    compute_dtype: optional cast for the GEMM operands (e.g. jnp.bfloat16);
                   accumulation is always f32.
    out_dtype:     output dtype (defaults to x.dtype).
    """
    B, C, H, W = x.shape
    kh, kw = kernel_size
    embed_dim = weight.shape[0]
    assert H % kh == 0 and W % kw == 0, "padding=0, stride=kernel: dims must divide"
    Hp, Wp = H // kh, W // kw

    M = B * Hp * Wp
    K = C * kh * kw
    N = embed_dim
    out_dtype = out_dtype if out_dtype is not None else x.dtype

    # --- glue (plain JAX): extract non-overlapping patches and flatten --------
    # (B, C, Hp, kh, Wp, kw) -> (B, Hp, Wp, C, kh, kw) -> (B*Hp*Wp, C*kh*kw)
    patches = x.reshape(B, C, Hp, kh, Wp, kw).transpose(0, 2, 4, 1, 3, 5)
    patches = patches.reshape(M, K)

    # Conv weight (O, C, kh, kw) flattened over (C, kh, kw) -> (K, O)
    w_mat = weight.reshape(embed_dim, K).T
    b_mat = bias.reshape(1, embed_dim)

    if compute_dtype is not None:
        patches = patches.astype(compute_dtype)
        w_mat = w_mat.astype(compute_dtype)

    # --- lane-dense output: pad N up to a multiple of 128 ---------------------
    Np = _round_up(N, 128)
    if Np != N:
        w_mat = jnp.pad(w_mat, ((0, 0), (0, Np - N)))
        b_mat = jnp.pad(b_mat, ((0, 0), (0, Np - N)))

    # --- M tiling: TM multiple of 8, pad M up to a multiple of TM -------------
    TM = max(8, _round_up(min(block_m, _round_up(M, 8)), 8))
    Mp = _round_up(M, TM)
    if Mp != M:
        patches = jnp.pad(patches, ((0, Mp - M), (0, 0)))

    grid = (Mp // TM,)

    # --- hot path in Pallas: tiled patches @ W + b on the MXU ------------------
    out = pl.pallas_call(
        _patch_embed_kernel,
        out_shape=jax.ShapeDtypeStruct((Mp, Np), out_dtype),
        grid_spec=pl.GridSpec(
            grid=grid,
            in_specs=[
                pl.BlockSpec((TM, K), lambda i: (i, 0)),   # streamed patch tiles
                pl.BlockSpec((K, Np), lambda i: (0, 0)),   # resident weight
                pl.BlockSpec((1, Np), lambda i: (0, 0)),   # resident bias
            ],
            out_specs=pl.BlockSpec((TM, Np), lambda i: (i, 0)),
        ),
        compiler_params=pltpu.CompilerParams(
            dimension_semantics=("parallel",)),
    )(patches, w_mat, b_mat)

    out = out[:M, :N]
    return out.reshape(B, Hp, Wp, embed_dim)


def _conv_reference(x, weight, bias, kernel_size):
    kh, kw = kernel_size
    embed_dim = weight.shape[0]
    ref = jax.lax.conv_general_dilated(
        x, weight, window_strides=(kh, kw), padding="VALID",
        dimension_numbers=("NCHW", "OIHW", "NCHW"))
    return jnp.transpose(ref + bias.reshape(1, embed_dim, 1, 1), (0, 2, 3, 1))


if __name__ == "__main__":
    # Small shapes consistent with the module: B=2, in_chans=4, 16x16 image,
    # kernel=stride=(8,8), embed_dim=32  ->  output (2, 2, 2, 32).
    B, C, H, W = 2, 4, 16, 16
    kh, kw = 8, 8
    embed_dim = 32

    key = jax.random.PRNGKey(0)
    kx, kw_key, kb_key = jax.random.split(key, 3)
    x = jax.random.normal(kx, (B, C, H, W), dtype=jnp.float32)
    weight = jax.random.normal(kw_key, (embed_dim, C, kh, kw), dtype=jnp.float32) * 0.02
    bias = jax.random.normal(kb_key, (embed_dim,), dtype=jnp.float32) * 0.02

    # ---- run 1: f32 operands, strict check ------------------------------------
    run_f32 = jax.jit(functools.partial(patch_embed, kernel_size=(kh, kw)))
    out = jax.block_until_ready(run_f32(x, weight, bias))
    assert out.shape == (B, H // kh, W // kw, embed_dim), out.shape
    ref = _conv_reference(x, weight, bias, (kh, kw))
    assert jnp.allclose(out, ref, atol=1e-4, rtol=1e-4)

    # ---- run 2: bf16 operands (f32 accumulate), loose check -------------------
    run_bf16 = jax.jit(functools.partial(
        patch_embed, kernel_size=(kh, kw),
        compute_dtype=jnp.bfloat16, out_dtype=jnp.float32))
    out_bf16 = jax.block_until_ready(run_bf16(x, weight, bias))
    assert jnp.allclose(out_bf16, ref, atol=5e-2, rtol=5e-2)

    # ---- run 3: bigger grid (multiple M tiles + M padding) to exercise tiling -
    B2, H2, W2 = 3, 32, 32
    x2 = jax.random.normal(kx, (B2, C, H2, W2), dtype=jnp.float32)
    run_tiled = jax.jit(functools.partial(
        patch_embed, kernel_size=(kh, kw), block_m=32))  # M=48 -> grid=(2,), pad
    out2 = jax.block_until_ready(run_tiled(x2, weight, bias))
    ref2 = _conv_reference(x2, weight, bias, (kh, kw))
    assert out2.shape == (B2, H2 // kh, W2 // kw, embed_dim), out2.shape
    assert jnp.allclose(out2, ref2, atol=1e-4, rtol=1e-4)

    print("KERNEL_OK")
</pallas_src>

<mosaic_0001>
module attributes {stable_mosaic.version = 11 : i64} {
  func.func @_patch_embed_kernel(%arg0: i32, %arg1: memref<8x256xf32, #tpu.memory_space<vmem>>, %arg2: memref<256x128xf32, #tpu.memory_space<vmem>>, %arg3: memref<1x128xf32, #tpu.memory_space<vmem>>, %arg4: memref<8x128xf32, #tpu.memory_space<vmem>>) attributes {dimension_semantics = [#tpu.dimension_semantics<parallel>], iteration_bounds = array<i64: 1>, scalar_prefetch = 0 : i64, scratch_operands = 0 : i64, tpu.core_type = #tpu.core_type<tc>, window_params = [{transform_indices = @transform_0, window_bounds = array<i64: 8, 256>}, {pipeline_mode = #tpu.pipeline_mode<synchronous>, transform_indices = @transform_1, window_bounds = array<i64: 256, 128>}, {pipeline_mode = #tpu.pipeline_mode<synchronous>, transform_indices = @transform_2, window_bounds = array<i64: 1, 128>}, {transform_indices = @transform_3, window_bounds = array<i64: 8, 128>}]} {
    %c0 = arith.constant 0 : index
    %c0_0 = arith.constant 0 : index
    %0 = vector.load %arg1[%c0, %c0_0] : memref<8x256xf32, #tpu.memory_space<vmem>>, vector<8x256xf32>
    %c0_1 = arith.constant 0 : index
    %c0_2 = arith.constant 0 : index
    %1 = vector.load %arg2[%c0_1, %c0_2] : memref<256x128xf32, #tpu.memory_space<vmem>>, vector<256x128xf32>
    %cst = arith.constant dense<0.000000e+00> : vector<8x128xf32>
    %2 = tpu.matmul %0, %1, %cst {dimension_numbers = #tpu.dot_dimension_numbers<[1], [0], [0], [1], [0, 0, 1, 1], [], []>} : vector<8x256xf32>, vector<256x128xf32>, vector<8x128xf32> -> vector<8x128xf32>
    %c0_3 = arith.constant 0 : index
    %c0_4 = arith.constant 0 : index
    %3 = vector.load %arg3[%c0_3, %c0_4] : memref<1x128xf32, #tpu.memory_space<vmem>>, vector<1x128xf32>
    %4 = vector.broadcast %3 : vector<1x128xf32> to vector<8x128xf32>
    %5 = arith.addf %2, %4 : vector<8x128xf32>
    %c0_5 = arith.constant 0 : index
    %c0_6 = arith.constant 0 : index
    %6 = vector.load %arg4[%c0_5, %c0_6] : memref<8x128xf32, #tpu.memory_space<vmem>>, vector<8x128xf32>
    tpu.vector_store %arg4[%c0_5, %c0_6], %5 {strides = array<i32>} : memref<8x128xf32, #tpu.memory_space<vmem>>, vector<8x128xf32>,
    return
  }
  func.func @transform_0(%arg0: i32) -> (i32, i32) {
    %c0_i32 = arith.constant 0 : i32
    %c0_i32_0 = arith.constant 0 : i32
    return %arg0, %c0_i32 : i32, i32
  }
  func.func @transform_1(%arg0: i32) -> (i32, i32) {
    %c0_i32 = arith.constant 0 : i32
    %c0_i32_0 = arith.constant 0 : i32
    %c0_i32_1 = arith.constant 0 : i32
    return %c0_i32, %c0_i32_0 : i32, i32
  }
  func.func @transform_2(%arg0: i32) -> (i32, i32) {
    %c0_i32 = arith.constant 0 : i32
    %c0_i32_0 = arith.constant 0 : i32
    %c0_i32_1 = arith.constant 0 : i32
    return %c0_i32, %c0_i32_0 : i32, i32
  }
  func.func @transform_3(%arg0: i32) -> (i32, i32) {
    %c0_i32 = arith.constant 0 : i32
    %c0_i32_0 = arith.constant 0 : i32
    return %arg0, %c0_i32 : i32, i32
  }
}

</mosaic_0001>

<llo_original>
// kernel: patch_embed.1
$region0: #{patch_embed.1}
  #allocation0 [shape = 'u32[]', space=smem, size = 0x4, offset = 0x4, fixed_abs, tag = 'smem constant byte address 0x4 - core index']
  #allocation1 [shape = 'u32[144,128]{1,0:T(1,128)}', space=vmem, size = 0x12000, scoped, tag = 'internal scratch']
  %s0 = inlined_call_operand.vmem [shape: f32[8,256], index: 0, kind: input, shape index: {}]
  %s1 = inlined_call_operand.vmem [shape: f32[256,128], index: 1, kind: input, shape index: {}]
  %s2 = inlined_call_operand.vmem [shape: f32[1,128], index: 2, kind: input, shape index: {}]
  %s3 = inlined_call_operand.hbm [shape: f32[8,128], index: 3, kind: output, shape index: {}]
  %s4 = sld [smem:[#allocation0]]
  $region22: #{patch_embed.1} parent=0
    _
  %s6 = ssub.s32 1, %s4
  %s7 = scalar_select 0, %s6, %s4
  $region1: #{patch_embed.1} parent=0
    #allocation2 [shape = 'u8[4096]{0}', space=vmem, size = 0x1000, scoped, tag = 'output window, operand 0, single buffered']
    #allocation3 [shape = 's32[1]{0}', space=sflag, size = 0x4, scoped, tag = 'scoped memory for patch_embed.1']
    %8 = vsyncpa [#allocation3], 0
    // Predicated region
    $region2: #{patch_embed.1} parent=1 // pred_check
      _
    $region3: #{patch_embed.1} parent=1 // pred_check_branch
      %10 = sbr.rel (0) target = $region5
    $region4: #{patch_embed.1} parent=1 // pred_region
      _
    $region5: #{patch_embed.1} parent=1 // pred_fallthru
      _
    // Predicated region
    $region6: #{patch_embed.1} parent=1 // pred_check
      _
    $region7: #{patch_embed.1} parent=1 // pred_check_branch
      %12 = sbr.rel (0) target = $region9
    $region8: #{patch_embed.1} parent=1 // pred_region
      _
    $region9: #{patch_embed.1} parent=1 // pred_fallthru
      _
    // Predicated region
    $region10: #{patch_embed.1} parent=1 // pred_check
      _
    $region11: #{patch_embed.1} parent=1 // pred_check_branch
      %14 = sbr.rel (0) target = $region13
    $region12: #{patch_embed.1} parent=1 // pred_region
      _
    $region13: #{patch_embed.1} parent=1 // pred_fallthru
      _
    %v15 = vld [vmem:[%s0] sm:$0xff]
    %v16 = vld [vmem:[%s0 + $0x8] sm:$0xff]
    %v17 = vld [vmem:[%s1] sm:$0xff]
    %v18 = vld [vmem:[%s1 + $0x8] sm:$0xff]
    %v19 = vld [vmem:[%s1 + $0x10] sm:$0xff]
    %v20 = vld [vmem:[%s1 + $0x18] sm:$0xff]
    %v21 = vld [vmem:[%s1 + $0x20] sm:$0xff]
    %v22 = vld [vmem:[%s1 + $0x28] sm:$0xff]
    %v23 = vld [vmem:[%s1 + $0x30] sm:$0xff]
    %v24 = vld [vmem:[%s1 + $0x38] sm:$0xff]
    %v25 = vld [vmem:[%s1 + $0x40] sm:$0xff]
    %v26 = vld [vmem:[%s1 + $0x48] sm:$0xff]
    %v27 = vld [vmem:[%s1 + $0x50] sm:$0xff]
    %v28 = vld [vmem:[%s1 + $0x58] sm:$0xff]
    %v29 = vld [vmem:[%s1 + $0x60] sm:$0xff]
    %v30 = vld [vmem:[%s1 + $0x68] sm:$0xff]
    %v31 = vld [vmem:[%s1 + $0x70] sm:$0xff]
    %v32 = vld [vmem:[%s1 + $0x78] sm:$0xff]
    %v33 = vld [vmem:[%s1 + $0x80] sm:$0xff]
    %v34 = vld [vmem:[%s1 + $0x88] sm:$0xff]
    %v35 = vld [vmem:[%s1 + $0x90] sm:$0xff]
    %v36 = vld [vmem:[%s1 + $0x98] sm:$0xff]
    %v37 = vld [vmem:[%s1 + $0xa0] sm:$0xff]
    %v38 = vld [vmem:[%s1 + $0xa8] sm:$0xff]
    %v39 = vld [vmem:[%s1 + $0xb0] sm:$0xff]
    %v40 = vld [vmem:[%s1 + $0xb8] sm:$0xff]
    %v41 = vld [vmem:[%s1 + $0xc0] sm:$0xff]
    %v42 = vld [vmem:[%s1 + $0xc8] sm:$0xff]
    %v43 = vld [vmem:[%s1 + $0xd0] sm:$0xff]
    %v44 = vld [vmem:[%s1 + $0xd8] sm:$0xff]
    %v45 = vld [vmem:[%s1 + $0xe0] sm:$0xff]
    %v46 = vld [vmem:[%s1 + $0xe8] sm:$0xff]
    %v47 = vld [vmem:[%s1 + $0xf0] sm:$0xff]
    %v48 = vld [vmem:[%s1 + $0xf8] sm:$0xff]
    %v49 = vld [vmem:[%s2] sm:$0x1]
    %v51 = vlaneseq
    %v52 = vshrl.u32 %v51, 7
    %v53 = vsub.s32 0, %v52
    %v54 = vrot.slane %v49, %v53
    %56 = vmatprep.subr.mxu0 0.0
    %57 = vmatpush1.msra.mxu0 %v17
    %58 = vmatprep.subr.mxu0 0.0
    %59 = vmatpush1.msra.mxu0 %v18
    %60 = vmatprep.subr.mxu0 0.0
    %61 = vmatpush1.msra.mxu0 %v19
    %62 = vmatprep.subr.mxu0 0.0
    %63 = vmatpush1.msra.mxu0 %v20
    %64 = vmatprep.subr.mxu0 0.0
    %65 = vmatpush1.msra.mxu0 %v21
    %66 = vmatprep.subr.mxu0 0.0
    %67 = vmatpush1.msra.mxu0 %v22
    %68 = vmatprep.subr.mxu0 0.0
    %69 = vmatpush1.msra.mxu0 %v23
    %70 = vmatprep.subr.mxu0 0.0
    %71 = vmatpush1.msra.mxu0 %v24
    %72 = vmatprep.subr.mxu0 0.0
    %73 = vmatpush1.msra.mxu0 %v25
    %74 = vmatprep.subr.mxu0 0.0
    %75 = vmatpush1.msra.mxu0 %v26
    %76 = vmatprep.subr.mxu0 0.0
    %77 = vmatpush1.msra.mxu0 %v27
    %78 = vmatprep.subr.mxu0 0.0
    %79 = vmatpush1.msra.mxu0 %v28
    %80 = vmatprep.subr.mxu0 0.0
    %81 = vmatpush1.msra.mxu0 %v29
    %82 = vmatprep.subr.mxu0 0.0
    %83 = vmatpush1.msra.mxu0 %v30
    %84 = vmatprep.subr.mxu0 0.0
    %85 = vmatpush1.msra.mxu0 %v31
    %86 = vmatprep.subr.mxu0 0.0
    %87 = vmatpush1.msra.mxu0 %v32
    %88 = vmatprep.subr.mxu0 0.0
    %89 = vmatpush1.msra.mxu0 %v33
    %90 = vmatprep.subr.mxu0 0.0
    %91 = vmatpush1.msra.mxu0 %v34
    %92 = vmatprep.subr.mxu0 0.0
    %93 = vmatpush1.msra.mxu0 %v35
    %94 = vmatprep.subr.mxu0 0.0
    %95 = vmatpush1.msra.mxu0 %v36
    %96 = vmatprep.subr.mxu0 0.0
    %97 = vmatpush1.msra.mxu0 %v37
    %98 = vmatprep.subr.mxu0 0.0
    %99 = vmatpush1.msra.mxu0 %v38
    %100 = vmatprep.subr.mxu0 0.0
    %101 = vmatpush1.msra.mxu0 %v39
    %102 = vmatprep.subr.mxu0 0.0
    %103 = vmatpush1.msra.mxu0 %v40
    %104 = vmatprep.subr.mxu0 0.0
    %105 = vmatpush1.msra.mxu0 %v41
    %106 = vmatprep.subr.mxu0 0.0
    %107 = vmatpush1.msra.mxu0 %v42
    %108 = vmatprep.subr.mxu0 0.0
    %109 = vmatpush1.msra.mxu0 %v43
    %110 = vmatprep.subr.mxu0 0.0
    %111 = vmatpush1.msra.mxu0 %v44
    %112 = vmatprep.subr.mxu0 0.0
    %113 = vmatpush1.msra.mxu0 %v45
    %114 = vmatprep.subr.mxu0 0.0
    %115 = vmatpush1.msra.mxu0 %v46
    %116 = vmatprep.subr.mxu0 0.0
    %117 = vmatpush1.msra.mxu0 %v47
    %118 = vmatprep.subr.mxu0 0.0
    %119 = vmatpush1.msra.mxu0 %v48
    %120 = vmatprep.mubr.f32.mxu0 %v16
    %121 = vmatmul.mubr.f32.gmra.mrb[0].mxu0 %v15
    %v122 = vpop.f32.mrb[0].mxu0
    %v123 = vadd.f32 %v54, %v122
    %v124 = vpop.f32.mrb[0].mxu0
    %125 = vdwg.mxu0
    %126 = vst [vmem:[#allocation2] sm:$0xff] %v123
    // Predicated region
    $region14: #{patch_embed.1} parent=1 // pred_check
      _
    $region15: #{patch_embed.1} parent=1 // pred_check_branch
      %128 = sbr.rel (0) target = $region17
    $region16: #{patch_embed.1} parent=1 // pred_region
      %s130 = ssub.s32 128, 128
      %131 = vsyncadd [#allocation3], %s130
      %s133 = sshll.u32 [#allocation2], 4
      %s134 = int_to_ptr.vmem [resolvable:$true] %s133
      %136 = dma.vmem_to_hbm [thread:$0]  %s134, 128, %s3, [#allocation3]
    $region17: #{patch_embed.1} parent=1 // pred_fallthru
      _
    // Predicated region
    $region18: #{patch_embed.1} parent=1 // pred_check
      _
    $region19: #{patch_embed.1} parent=1 // pred_check_branch
      %138 = sbr.rel (0) target = $region21
    $region20: #{patch_embed.1} parent=1 // pred_region
      %139 = dma.done [#allocation3], 128
    $region21: #{patch_embed.1} parent=1 // pred_fallthru
      _
    %140 = vsyncpa [#allocation3], 1

</llo_original>
